<compile_context>
chip_gen: v6e
topology: v6e:2x2x1
jax: 0.10.0
libtpu: 0.0.40
codegen_flags: <defaults>
</compile_context>

<pallas_src>
import functools

import jax
import jax.numpy as jnp
from jax.experimental import pallas as pl
from jax.experimental.pallas import tpu as pltpu

_INV_SQRT2 = 0.7071067811865476  # 1/sqrt(2), hoisted constant


def _round_up(n, m):
    return ((n + m - 1) // m) * m


def _mlp_kernel(x_ref, w1_ref, b1_ref, w2_ref, b2_ref, o_ref):
    # fc1: (TB, D_in) @ (D_in, H_pad) + (1, H_pad)
    h = jnp.dot(x_ref[...], w1_ref[...], preferred_element_type=jnp.float32)
    h = h + b1_ref[...]
    # Exact GELU (erf-based, matches torch.nn.GELU() default).
    h = 0.5 * h * (1.0 + jax.lax.erf(h * _INV_SQRT2))
    # fc2: (TB, H_pad) @ (H_pad, D_out) + (1, D_out); D_out stays unpadded.
    y = jnp.dot(h, w2_ref[...], preferred_element_type=jnp.float32)
    o_ref[...] = (y + b2_ref[...]).astype(o_ref.dtype)


def prepare_params(w1, b1, w2, b2):
    """One-time setup: pad only the hidden dim to 128 lanes (exact padding).

    w1: (input_dim, hidden) -> (input_dim, h_pad)
    b1: (1, hidden)         -> (1, h_pad)
    w2: (hidden, output)    -> (h_pad, output)   (padded rows are zero)
    b2: (1, output)         -> unchanged
    """
    hidden = w1.shape[1]
    h_pad = _round_up(hidden, 128)
    w1_p = jnp.pad(w1, ((0, 0), (0, h_pad - hidden)))
    b1_p = jnp.pad(b1, ((0, 0), (0, h_pad - hidden)))
    w2_p = jnp.pad(w2, ((0, h_pad - hidden), (0, 0)))
    return w1_p, b1_p, w2_p, b2


@functools.partial(jax.jit, static_argnames=("block_b",))
def torch_model_forward(x, w1_p, b1_p, w2_p, b2, *, block_b=2048):
    """Pallas implementation of TorchModel.forward on pre-padded params.

    x   : (B, input_dim) float32
    w1_p: (input_dim, h_pad), b1_p: (1, h_pad)
    w2_p: (h_pad, output_dim), b2 : (1, output_dim)
    """
    B, d_in = x.shape
    h_pad = w1_p.shape[1]
    d_out = w2_p.shape[1]

    # Batch tile: multiple of 8 sublanes, capped at block_b. No batch padding
    # in HBM — the ragged final block is handled by Pallas masking.
    tb = min(_round_up(block_b, 8), _round_up(B, 8))
    grid = (pl.cdiv(B, tb),)

    return pl.pallas_call(
        _mlp_kernel,
        out_shape=jax.ShapeDtypeStruct((B, d_out), jnp.float32),
        grid=grid,
        in_specs=[
            # x: tiled over batch (last dim == full array dim, so legal as-is).
            pl.BlockSpec((tb, d_in), lambda i: (i, 0)),
            # Weights / biases: full arrays, resident in VMEM across the grid.
            pl.BlockSpec((d_in, h_pad), lambda i: (0, 0)),
            pl.BlockSpec((1, h_pad), lambda i: (0, 0)),
            pl.BlockSpec((h_pad, d_out), lambda i: (0, 0)),
            pl.BlockSpec((1, d_out), lambda i: (0, 0)),
        ],
        # Output is exactly (B, d_out): no lane padding, no post-slice.
        out_specs=pl.BlockSpec((tb, d_out), lambda i: (i, 0)),
        compiler_params=pltpu.CompilerParams(
            dimension_semantics=("parallel",),
        ),
    )(x, w1_p, b1_p, w2_p, b2)


def reference_forward(x, w1, b1, w2, b2):
    h = x @ w1 + b1
    h = 0.5 * h * (1.0 + jax.lax.erf(h * _INV_SQRT2))
    return h @ w2 + b2


if __name__ == "__main__":
    key = jax.random.PRNGKey(0)
    batch, input_dim, hidden_dim, output_dim = 8, 32, 40, 16

    k_x, k_w1, k_b1, k_w2, k_b2, k_x2 = jax.random.split(key, 6)
    x = jax.random.normal(k_x, (batch, input_dim), dtype=jnp.float32)

    # Deterministic init mimicking PyTorch Linear default (uniform +-1/sqrt(fan_in)).
    lim1 = 1.0 / jnp.sqrt(jnp.float32(input_dim))
    w1 = jax.random.uniform(k_w1, (input_dim, hidden_dim), jnp.float32, -lim1, lim1)
    b1 = jax.random.uniform(k_b1, (1, hidden_dim), jnp.float32, -lim1, lim1)
    lim2 = 1.0 / jnp.sqrt(jnp.float32(hidden_dim))
    w2 = jax.random.uniform(k_w2, (hidden_dim, output_dim), jnp.float32, -lim2, lim2)
    b2 = jax.random.uniform(k_b2, (1, output_dim), jnp.float32, -lim2, lim2)

    # One-time (non-jitted) padding of the hidden dim.
    w1_p, b1_p, w2_p, b2_u = prepare_params(w1, b1, w2, b2)

    # Small shape: single grid point, everything resident in VMEM.
    out = jax.block_until_ready(torch_model_forward(x, w1_p, b1_p, w2_p, b2_u))
    ref = reference_forward(x, w1, b1, w2, b2)
    assert out.shape == (batch, output_dim)
    assert jnp.allclose(out, ref, atol=1e-5, rtol=1e-5), "mismatch vs reference (small)"

    # Exercise the batch-tiled grid path with a ragged final block
    # (70 rows, 16-row tiles -> 5 grid steps, last block masked).
    batch2 = 70
    x2 = jax.random.normal(k_x2, (batch2, input_dim), dtype=jnp.float32)
    out2 = jax.block_until_ready(
        torch_model_forward(x2, w1_p, b1_p, w2_p, b2_u, block_b=16)
    )
    ref2 = reference_forward(x2, w1, b1, w2, b2)
    assert out2.shape == (batch2, output_dim)
    assert jnp.allclose(out2, ref2, atol=1e-5, rtol=1e-5), "mismatch vs reference (tiled)"

    print("KERNEL_OK")
</pallas_src>

<mosaic_0001>
module attributes {stable_mosaic.version = 11 : i64} {
  func.func @_mlp_kernel(%arg0: i32, %arg1: memref<8x32xf32, #tpu.memory_space<vmem>>, %arg2: memref<32x128xf32, #tpu.memory_space<vmem>>, %arg3: memref<1x128xf32, #tpu.memory_space<vmem>>, %arg4: memref<128x16xf32, #tpu.memory_space<vmem>>, %arg5: memref<1x16xf32, #tpu.memory_space<vmem>>, %arg6: memref<8x16xf32, #tpu.memory_space<vmem>>) attributes {dimension_semantics = [#tpu.dimension_semantics<parallel>], iteration_bounds = array<i64: 1>, scalar_prefetch = 0 : i64, scratch_operands = 0 : i64, tpu.core_type = #tpu.core_type<tc>, window_params = [{transform_indices = @transform_0, window_bounds = array<i64: 8, 32>}, {pipeline_mode = #tpu.pipeline_mode<synchronous>, transform_indices = @transform_1, window_bounds = array<i64: 32, 128>}, {pipeline_mode = #tpu.pipeline_mode<synchronous>, transform_indices = @transform_2, window_bounds = array<i64: 1, 128>}, {pipeline_mode = #tpu.pipeline_mode<synchronous>, transform_indices = @transform_3, window_bounds = array<i64: 128, 16>}, {pipeline_mode = #tpu.pipeline_mode<synchronous>, transform_indices = @transform_4, window_bounds = array<i64: 1, 16>}, {transform_indices = @transform_5, window_bounds = array<i64: 8, 16>}]} {
    %c0 = arith.constant 0 : index
    %c0_0 = arith.constant 0 : index
    %0 = vector.load %arg1[%c0, %c0_0] : memref<8x32xf32, #tpu.memory_space<vmem>>, vector<8x32xf32>
    %c0_1 = arith.constant 0 : index
    %c0_2 = arith.constant 0 : index
    %1 = vector.load %arg2[%c0_1, %c0_2] : memref<32x128xf32, #tpu.memory_space<vmem>>, vector<32x128xf32>
    %cst = arith.constant dense<0.000000e+00> : vector<8x128xf32>
    %2 = tpu.matmul %0, %1, %cst {dimension_numbers = #tpu.dot_dimension_numbers<[1], [0], [0], [1], [0, 0, 1, 1], [], []>} : vector<8x32xf32>, vector<32x128xf32>, vector<8x128xf32> -> vector<8x128xf32>
    %c0_3 = arith.constant 0 : index
    %c0_4 = arith.constant 0 : index
    %3 = vector.load %arg3[%c0_3, %c0_4] : memref<1x128xf32, #tpu.memory_space<vmem>>, vector<1x128xf32>
    %4 = vector.broadcast %3 : vector<1x128xf32> to vector<8x128xf32>
    %5 = arith.addf %2, %4 : vector<8x128xf32>
    %cst_5 = arith.constant 5.000000e-01 : f32
    %6 = vector.broadcast %cst_5 : f32 to vector<8x128xf32>
    %7 = arith.mulf %6, %5 : vector<8x128xf32>
    %cst_6 = arith.constant 0.707106769 : f32
    %8 = vector.broadcast %cst_6 : f32 to vector<8x128xf32>
    %9 = arith.mulf %5, %8 : vector<8x128xf32>
    %10 = math.erf %9 : vector<8x128xf32>
    %cst_7 = arith.constant 1.000000e+00 : f32
    %11 = vector.broadcast %cst_7 : f32 to vector<8x128xf32>
    %12 = arith.addf %11, %10 : vector<8x128xf32>
    %13 = arith.mulf %7, %12 : vector<8x128xf32>
    %c0_8 = arith.constant 0 : index
    %c0_9 = arith.constant 0 : index
    %14 = vector.load %arg4[%c0_8, %c0_9] : memref<128x16xf32, #tpu.memory_space<vmem>>, vector<128x16xf32>
    %cst_10 = arith.constant dense<0.000000e+00> : vector<8x16xf32>
    %15 = tpu.matmul %13, %14, %cst_10 {dimension_numbers = #tpu.dot_dimension_numbers<[1], [0], [0], [1], [0, 0, 1, 1], [], []>} : vector<8x128xf32>, vector<128x16xf32>, vector<8x16xf32> -> vector<8x16xf32>
    %c0_11 = arith.constant 0 : index
    %c0_12 = arith.constant 0 : index
    %16 = vector.load %arg5[%c0_11, %c0_12] : memref<1x16xf32, #tpu.memory_space<vmem>>, vector<1x16xf32>
    %17 = vector.broadcast %16 : vector<1x16xf32> to vector<8x16xf32>
    %18 = arith.addf %15, %17 : vector<8x16xf32>
    %c0_13 = arith.constant 0 : index
    %c0_14 = arith.constant 0 : index
    %19 = vector.load %arg6[%c0_13, %c0_14] : memref<8x16xf32, #tpu.memory_space<vmem>>, vector<8x16xf32>
    tpu.vector_store %arg6[%c0_13, %c0_14], %18 {strides = array<i32>} : memref<8x16xf32, #tpu.memory_space<vmem>>, vector<8x16xf32>,
    return
  }
  func.func @transform_0(%arg0: i32) -> (i32, i32) {
    %c0_i32 = arith.constant 0 : i32
    %c0_i32_0 = arith.constant 0 : i32
    return %arg0, %c0_i32 : i32, i32
  }
  func.func @transform_1(%arg0: i32) -> (i32, i32) {
    %c0_i32 = arith.constant 0 : i32
    %c0_i32_0 = arith.constant 0 : i32
    %c0_i32_1 = arith.constant 0 : i32
    return %c0_i32, %c0_i32_0 : i32, i32
  }
  func.func @transform_2(%arg0: i32) -> (i32, i32) {
    %c0_i32 = arith.constant 0 : i32
    %c0_i32_0 = arith.constant 0 : i32
    %c0_i32_1 = arith.constant 0 : i32
    return %c0_i32, %c0_i32_0 : i32, i32
  }
  func.func @transform_3(%arg0: i32) -> (i32, i32) {
    %c0_i32 = arith.constant 0 : i32
    %c0_i32_0 = arith.constant 0 : i32
    %c0_i32_1 = arith.constant 0 : i32
    return %c0_i32, %c0_i32_0 : i32, i32
  }
  func.func @transform_4(%arg0: i32) -> (i32, i32) {
    %c0_i32 = arith.constant 0 : i32
    %c0_i32_0 = arith.constant 0 : i32
    %c0_i32_1 = arith.constant 0 : i32
    return %c0_i32, %c0_i32_0 : i32, i32
  }
  func.func @transform_5(%arg0: i32) -> (i32, i32) {
    %c0_i32 = arith.constant 0 : i32
    %c0_i32_0 = arith.constant 0 : i32
    return %arg0, %c0_i32 : i32, i32
  }
}

</mosaic_0001>

<llo_original>
// kernel: torch_model_forward.1
$region0: #{torch_model_forward.1}
  #allocation0 [shape = 'u32[]', space=smem, size = 0x4, offset = 0x4, fixed_abs, tag = 'smem constant byte address 0x4 - core index']
  #allocation1 [shape = 'u32[144,128]{1,0:T(1,128)}', space=vmem, size = 0x12000, scoped, tag = 'internal scratch']
  %s0 = inlined_call_operand.vmem [shape: f32[8,32], index: 0, kind: input, shape index: {}]
  %s1 = inlined_call_operand.vmem [shape: f32[32,128], index: 1, kind: input, shape index: {}]
  %s2 = inlined_call_operand.vmem [shape: f32[1,128], index: 2, kind: input, shape index: {}]
  %s3 = inlined_call_operand.vmem [shape: f32[128,16], index: 3, kind: input, shape index: {}]
  %s4 = inlined_call_operand.vmem [shape: f32[1,16], index: 4, kind: input, shape index: {}]
  %s5 = inlined_call_operand.hbm [shape: f32[8,16], index: 5, kind: output, shape index: {}]
  %s6 = sld [smem:[#allocation0]]
  $region30: #{torch_model_forward.1} parent=0
    _
  %s8 = ssub.s32 1, %s6
  %s9 = scalar_select 0, %s8, %s6
  $region1: #{torch_model_forward.1} parent=0
    #allocation2 [shape = 'u8[4096]{0}', space=vmem, size = 0x1000, scoped, tag = 'output window, operand 0, single buffered']
    #allocation3 [shape = 's32[1]{0}', space=sflag, size = 0x4, scoped, tag = 'scoped memory for torch_model_forward.1']
    %10 = vsyncpa [#allocation3], 0
    // Predicated region
    $region2: #{torch_model_forward.1} parent=1 // pred_check
      _
    $region3: #{torch_model_forward.1} parent=1 // pred_check_branch
      %12 = sbr.rel (0) target = $region5
    $region4: #{torch_model_forward.1} parent=1 // pred_region
      _
    $region5: #{torch_model_forward.1} parent=1 // pred_fallthru
      _
    // Predicated region
    $region6: #{torch_model_forward.1} parent=1 // pred_check
      _
    $region7: #{torch_model_forward.1} parent=1 // pred_check_branch
      %14 = sbr.rel (0) target = $region9
    $region8: #{torch_model_forward.1} parent=1 // pred_region
      _
    $region9: #{torch_model_forward.1} parent=1 // pred_fallthru
      _
    // Predicated region
    $region10: #{torch_model_forward.1} parent=1 // pred_check
      _
    $region11: #{torch_model_forward.1} parent=1 // pred_check_branch
      %16 = sbr.rel (0) target = $region13
    $region12: #{torch_model_forward.1} parent=1 // pred_region
      _
    $region13: #{torch_model_forward.1} parent=1 // pred_fallthru
      _
    // Predicated region
    $region14: #{torch_model_forward.1} parent=1 // pred_check
      _
    $region15: #{torch_model_forward.1} parent=1 // pred_check_branch
      %18 = sbr.rel (0) target = $region17
    $region16: #{torch_model_forward.1} parent=1 // pred_region
      _
    $region17: #{torch_model_forward.1} parent=1 // pred_fallthru
      _
    // Predicated region
    $region18: #{torch_model_forward.1} parent=1 // pred_check
      _
    $region19: #{torch_model_forward.1} parent=1 // pred_check_branch
      %20 = sbr.rel (0) target = $region21
    $region20: #{torch_model_forward.1} parent=1 // pred_region
      _
    $region21: #{torch_model_forward.1} parent=1 // pred_fallthru
      _
    %v21 = vld [vmem:[%s0] sm:$0xff]
    %v22 = vld [vmem:[%s1] sm:$0xff]
    %v23 = vld [vmem:[%s1 + $0x8] sm:$0xff]
    %v24 = vld [vmem:[%s1 + $0x10] sm:$0xff]
    %v25 = vld [vmem:[%s1 + $0x18] sm:$0xff]
    %v26 = vld [vmem:[%s2] sm:$0x1]
    %v28 = vlaneseq
    %v29 = vshrl.u32 %v28, 7
    %v30 = vsub.s32 0, %v29
    %v31 = vrot.slane %v26, %v30
    %vm33 = vcmask 261120
    %v35 = vsel %vm33, %v21, 0
    %37 = vmatprep.subr.mxu0 0.0
    %38 = vmatpush1.msra.mxu0 0.0
    %39 = vmatprep.subr.mxu0 0.0
    %40 = vmatpush1.msra.mxu0 0.0
    %41 = vmatprep.subr.mxu0 0.0
    %42 = vmatpush1.msra.mxu0 0.0
    %43 = vmatprep.subr.mxu0 0.0
    %44 = vmatpush1.msra.mxu0 0.0
    %45 = vmatprep.subr.mxu0 0.0
    %46 = vmatpush1.msra.mxu0 0.0
    %47 = vmatprep.subr.mxu0 0.0
    %48 = vmatpush1.msra.mxu0 0.0
    %49 = vmatprep.subr.mxu0 0.0
    %50 = vmatpush1.msra.mxu0 0.0
    %51 = vmatprep.subr.mxu0 0.0
    %52 = vmatpush1.msra.mxu0 0.0
    %53 = vmatprep.subr.mxu0 0.0
    %54 = vmatpush1.msra.mxu0 0.0
    %55 = vmatprep.subr.mxu0 0.0
    %56 = vmatpush1.msra.mxu0 0.0
    %57 = vmatprep.subr.mxu0 0.0
    %58 = vmatpush1.msra.mxu0 0.0
    %59 = vmatprep.subr.mxu0 0.0
    %60 = vmatpush1.msra.mxu0 0.0
    %61 = vmatprep.subr.mxu0 0.0
    %62 = vmatpush1.msra.mxu0 %v25
    %63 = vmatprep.subr.mxu0 0.0
    %64 = vmatpush1.msra.mxu0 %v24
    %65 = vmatprep.subr.mxu0 0.0
    %66 = vmatpush1.msra.mxu0 %v23
    %67 = vmatprep.subr.mxu0 0.0
    %68 = vmatpush1.msra.mxu0 %v22
    %69 = vmatprep.subr.mxu0 0.0
    %70 = vmatpush2.msra.mxu0 0.0
    %71 = vmatprep.subr.mxu0 0.0
    %72 = vmatpush2.msra.mxu0 0.0
    %73 = vmatprep.subr.mxu0 0.0
    %74 = vmatpush2.msra.mxu0 0.0
    %75 = vmatprep.subr.mxu0 0.0
    %76 = vmatpush2.msra.mxu0 0.0
    %77 = vmatprep.subr.mxu0 0.0
    %78 = vmatpush2.msra.mxu0 0.0
    %79 = vmatprep.subr.mxu0 0.0
    %80 = vmatpush2.msra.mxu0 0.0
    %81 = vmatprep.subr.mxu0 0.0
    %82 = vmatpush2.msra.mxu0 0.0
    %83 = vmatprep.subr.mxu0 0.0
    %84 = vmatpush2.msra.mxu0 0.0
    %85 = vmatprep.subr.mxu0 0.0
    %86 = vmatpush2.msra.mxu0 0.0
    %87 = vmatprep.subr.mxu0 0.0
    %88 = vmatpush2.msra.mxu0 0.0
    %89 = vmatprep.subr.mxu0 0.0
    %90 = vmatpush2.msra.mxu0 0.0
    %91 = vmatprep.subr.mxu0 0.0
    %92 = vmatpush2.msra.mxu0 0.0
    %93 = vmatprep.subr.mxu0 0.0
    %94 = vmatpush2.msra.mxu0 0.0
    %95 = vmatprep.subr.mxu0 0.0
    %96 = vmatpush2.msra.mxu0 0.0
    %97 = vmatprep.subr.mxu0 0.0
    %98 = vmatpush2.msra.mxu0 0.0
    %99 = vmatprep.subr.mxu0 0.0
    %100 = vmatpush2.msra.mxu0 0.0
    %101 = vmatprep.mubr.f32.mxu0 0.0
    %102 = vmatmul.mubr.f32.gmra.mxu0 %v35
    %v103 = vpop.f32.mrf.mxu0
    %v104 = vadd.f32 %v31, %v103
    %v105 = vpop.f32.mrf.mxu0
    %106 = vdwg.mxu0
    %v107 = vmul.f32 %v104, 0.5
    %v108 = vmul.f32 %v104, 0.70710677
    %v109 = verf.f32.pop %v108
    %v110 = vadd.f32 %v109, 1.0
    %v111 = vmul.f32 %v107, %v110
    %v112 = vld [vmem:[%s3] sm:$0xff]
    %v113 = vld [vmem:[%s3 + $0x8] sm:$0xff]
    %v114 = vld [vmem:[%s3 + $0x10] sm:$0xff]
    %v115 = vld [vmem:[%s3 + $0x18] sm:$0xff]
    %v116 = vld [vmem:[%s3 + $0x20] sm:$0xff]
    %v117 = vld [vmem:[%s3 + $0x28] sm:$0xff]
    %v118 = vld [vmem:[%s3 + $0x30] sm:$0xff]
    %v119 = vld [vmem:[%s3 + $0x38] sm:$0xff]
    %v120 = vld [vmem:[%s3 + $0x40] sm:$0xff]
    %v121 = vld [vmem:[%s3 + $0x48] sm:$0xff]
    %v122 = vld [vmem:[%s3 + $0x50] sm:$0xff]
    %v123 = vld [vmem:[%s3 + $0x58] sm:$0xff]
    %v124 = vld [vmem:[%s3 + $0x60] sm:$0xff]
    %v125 = vld [vmem:[%s3 + $0x68] sm:$0xff]
    %v126 = vld [vmem:[%s3 + $0x70] sm:$0xff]
    %v127 = vld [vmem:[%s3 + $0x78] sm:$0xff]
    %v128 = vld [vmem:[%s4] sm:$0x1]
    %v130 = vlaneseq
    %v131 = vshrl.u32 %v130, 7
    %v132 = vsub.s32 0, %v131
    %v133 = vrot.slane %v128, %v132
    %135 = vmatprep.subr.mxu0 0.0
    %136 = vmatpush1.msra.mxu0 %v127
    %137 = vmatprep.subr.mxu0 0.0
    %138 = vmatpush1.msra.mxu0 %v126
    %139 = vmatprep.subr.mxu0 0.0
    %140 = vmatpush1.msra.mxu0 %v125
    %141 = vmatprep.subr.mxu0 0.0
    %142 = vmatpush1.msra.mxu0 %v124
    %143 = vmatprep.subr.mxu0 0.0
    %144 = vmatpush1.msra.mxu0 %v123
    %145 = vmatprep.subr.mxu0 0.0
    %146 = vmatpush1.msra.mxu0 %v122
    %147 = vmatprep.subr.mxu0 0.0
    %148 = vmatpush1.msra.mxu0 %v121
    %149 = vmatprep.subr.mxu0 0.0
    %150 = vmatpush1.msra.mxu0 %v120
    %151 = vmatprep.subr.mxu0 0.0
    %152 = vmatpush1.msra.mxu0 %v119
    %153 = vmatprep.subr.mxu0 0.0
    %154 = vmatpush1.msra.mxu0 %v118
    %155 = vmatprep.subr.mxu0 0.0
    %156 = vmatpush1.msra.mxu0 %v117
    %157 = vmatprep.subr.mxu0 0.0
    %158 = vmatpush1.msra.mxu0 %v116
    %159 = vmatprep.subr.mxu0 0.0
    %160 = vmatpush1.msra.mxu0 %v115
    %161 = vmatprep.subr.mxu0 0.0
    %162 = vmatpush1.msra.mxu0 %v114
    %163 = vmatprep.subr.mxu0 0.0
    %164 = vmatpush1.msra.mxu0 %v113
    %165 = vmatprep.subr.mxu0 0.0
    %166 = vmatpush1.msra.mxu0 %v112
    %167 = vmatprep.subr.mxu0 0.0
    %168 = vmatpush2.msra.mxu0 0.0
    %169 = vmatprep.subr.mxu0 0.0
    %170 = vmatpush2.msra.mxu0 0.0
    %171 = vmatprep.subr.mxu0 0.0
    %172 = vmatpush2.msra.mxu0 0.0
    %173 = vmatprep.subr.mxu0 0.0
    %174 = vmatpush2.msra.mxu0 0.0
    %175 = vmatprep.subr.mxu0 0.0
    %176 = vmatpush2.msra.mxu0 0.0
    %177 = vmatprep.subr.mxu0 0.0
    %178 = vmatpush2.msra.mxu0 0.0
    %179 = vmatprep.subr.mxu0 0.0
    %180 = vmatpush2.msra.mxu0 0.0
    %181 = vmatprep.subr.mxu0 0.0
    %182 = vmatpush2.msra.mxu0 0.0
    %183 = vmatprep.subr.mxu0 0.0
    %184 = vmatpush2.msra.mxu0 0.0
    %185 = vmatprep.subr.mxu0 0.0
    %186 = vmatpush2.msra.mxu0 0.0
    %187 = vmatprep.subr.mxu0 0.0
    %188 = vmatpush2.msra.mxu0 0.0
    %189 = vmatprep.subr.mxu0 0.0
    %190 = vmatpush2.msra.mxu0 0.0
    %191 = vmatprep.subr.mxu0 0.0
    %192 = vmatpush2.msra.mxu0 0.0
    %193 = vmatprep.subr.mxu0 0.0
    %194 = vmatpush2.msra.mxu0 0.0
    %195 = vmatprep.subr.mxu0 0.0
    %196 = vmatpush2.msra.mxu0 0.0
    %197 = vmatprep.subr.mxu0 0.0
    %198 = vmatpush2.msra.mxu0 0.0
    %199 = vmatprep.mubr.f32.mxu0 0.0
    %200 = vmatmul.mubr.f32.gmra.mxu0 %v111
    %v201 = vpop.f32.mrf.mxu0
    %v202 = vadd.f32 %v133, %v201
    %v203 = vpop.f32.mrf.mxu0
    %204 = vdwg.mxu0
    %vm205 = vcmask 130048
    %206 = vst.msk [vmem:[#allocation2] sm:$0xff] %vm205, %v202
    // Predicated region
    $region22: #{torch_model_forward.1} parent=1 // pred_check
      _
    $region23: #{torch_model_forward.1} parent=1 // pred_check_branch
      %208 = sbr.rel (0) target = $region25
    $region24: #{torch_model_forward.1} parent=1 // pred_region
      %s210 = ssub.s32 128, 128
      %211 = vsyncadd [#allocation3], %s210
      %s213 = sshll.u32 [#allocation2], 4
      %s214 = int_to_ptr.vmem [resolvable:$true] %s213
      %216 = dma.vmem_to_hbm [thread:$0]  %s214, 128, %s5, [#allocation3]
    $region25: #{torch_model_forward.1} parent=1 // pred_fallthru
      _
    // Predicated region
    $region26: #{torch_model_forward.1} parent=1 // pred_check
      _
    $region27: #{torch_model_forward.1} parent=1 // pred_check_branch
      %218 = sbr.rel (0) target = $region29
    $region28: #{torch_model_forward.1} parent=1 // pred_region
      %219 = dma.done [#allocation3], 128
    $region29: #{torch_model_forward.1} parent=1 // pred_fallthru
      _
    %220 = vsyncpa [#allocation3], 1

</llo_original>
